<compile_context>
chip_gen: v7x
topology: tpu7x:2x2x1
jax: 0.10.0
libtpu: 0.0.40
codegen_flags: <defaults>
</compile_context>

<pallas_src>
import functools

import jax
import jax.numpy as jnp
from jax.experimental import pallas as pl
from jax.experimental.pallas import tpu as pltpu


def _gdn_kernel(x_ref, gamma_ref, beta_ref, o_ref, *, inverse, use_mxu):
    # x_ref:     (C, T)  activations: channels on sublanes, pixels on lanes
    # gamma_ref: (C, C)  reparameterized gamma[co, ci] (precomputed in wrapper)
    # beta_ref:  (C, 1)  reparameterized beta (precomputed in wrapper)
    x = x_ref[...]
    x2 = x * x
    g = gamma_ref[...]
    b = beta_ref[...]

    if use_mxu:
        # 1x1 conv == channel matmul: norm_sq[co, p] = sum_ci g[co, ci]*x2[ci, p] + b[co]
        norm_sq = jnp.dot(g, x2, preferred_element_type=jnp.float32) + b
    else:
        # Small-C VPU path: C broadcast fused multiply-adds per output channel;
        # avoids MXU push/pop latency for a tiny (C x C) contraction.
        c = x.shape[0]
        norm_sq = jnp.broadcast_to(b, x.shape)
        for ci in range(c):
            norm_sq = norm_sq + g[:, ci:ci + 1] * x2[ci:ci + 1, :]

    if inverse:
        o_ref[...] = (x * jnp.sqrt(norm_sq)).astype(o_ref.dtype)
    else:
        # x / sqrt(s) == x * rsqrt(s): one EUP op + one VALU multiply.
        o_ref[...] = (x * jax.lax.rsqrt(norm_sq)).astype(o_ref.dtype)


def _pick_tile_hw(hw, c, *, vmem_budget_bytes=24 << 20, target_block_bytes=4 << 20):
    """Largest pixel tile that keeps in+out double-buffered f32 tiles in VMEM.

    Budgeted against v7x's 32 MiB default scoped VMEM (the smallest of
    v5e/v6e/v7x) with headroom; 4 live (C, tile) f32 buffers = input + output,
    each double-buffered.
    """
    bytes_per_pixel_column = 4 * c
    budget_tile = vmem_budget_bytes // (4 * bytes_per_pixel_column)
    target_tile = target_block_bytes // bytes_per_pixel_column
    tile = max(128, min(budget_tile, target_tile))
    tile = (tile // 128) * 128
    if hw <= tile:
        return hw  # single block covers the whole pixel axis (full-dim rule)
    return tile


def gdn_forward(x, beta_param, gamma_param, *, inverse=False,
                beta_min=1e-6, reparam_offset=2.0 ** (-18), tile_hw=None):
    """GDN forward. x: (N, C, *spatial) float32. Returns same shape/dtype."""
    orig_shape = x.shape
    orig_dtype = x.dtype
    n, c = orig_shape[0], orig_shape[1]
    hw = 1
    for d in orig_shape[2:]:
        hw *= d

    # Free reshape: channels stay on the contracting (sublane) axis,
    # pixels land on the lane axis.  Handles the 5-D "unfold" case too.
    x3 = x.reshape(n, c, hw).astype(jnp.float32)

    # Hoist the O(C^2) reparameterization out of the per-tile kernel body.
    pedestal = reparam_offset ** 2
    beta_bound = (beta_min + reparam_offset ** 2) ** 0.5
    gamma_bound = reparam_offset
    gamma = jnp.maximum(gamma_param.astype(jnp.float32), gamma_bound) ** 2 - pedestal   # (C, C)
    beta = (jnp.maximum(beta_param.astype(jnp.float32), beta_bound) ** 2
            - pedestal).reshape(c, 1)                                                    # (C, 1)

    if tile_hw is None:
        tile_hw = _pick_tile_hw(hw, c)

    grid = (n, pl.cdiv(hw, tile_hw))
    kernel = functools.partial(_gdn_kernel, inverse=inverse, use_mxu=(c > 8))

    m = n * hw
    cost = pl.CostEstimate(
        flops=2 * m * c * c,
        transcendentals=m * c,
        bytes_accessed=(2 * m * c + c * c + c) * 4,
    )

    # NOTE: ragged last pixel block computes on stale VMEM lanes; those lanes are
    # write-masked by Pallas, so the visible output is unaffected.
    out3 = pl.pallas_call(
        kernel,
        out_shape=jax.ShapeDtypeStruct((n, c, hw), jnp.float32),
        grid_spec=pltpu.PrefetchScalarGridSpec(
            num_scalar_prefetch=0,
            grid=grid,
            in_specs=[
                pl.BlockSpec((None, c, tile_hw), lambda b, j: (b, 0, j)),  # x tile
                pl.BlockSpec((c, c), lambda b, j: (0, 0)),                 # gamma (const)
                pl.BlockSpec((c, 1), lambda b, j: (0, 0)),                 # beta (const)
            ],
            out_specs=pl.BlockSpec((None, c, tile_hw), lambda b, j: (b, 0, j)),
        ),
        compiler_params=pltpu.CompilerParams(
            dimension_semantics=("parallel", "parallel"),
            vmem_limit_bytes=32 * 1024 * 1024,
        ),
        cost_estimate=cost,
    )(x3, gamma, beta)

    return out3.reshape(orig_shape).astype(orig_dtype)


def _gdn_reference(x_nchw, beta_param, gamma_param, *,
                   inverse=False, beta_min=1e-6, reparam_offset=2.0 ** (-18)):
    """Pure-JAX reference mirroring the PyTorch forward."""
    pedestal = reparam_offset ** 2
    beta_bound = (beta_min + reparam_offset ** 2) ** 0.5
    gamma_bound = reparam_offset
    beta = jnp.maximum(beta_param, beta_bound) ** 2 - pedestal
    gamma = jnp.maximum(gamma_param, gamma_bound) ** 2 - pedestal
    x2 = x_nchw ** 2
    norm = jnp.einsum('oc,nchw->nohw', gamma, x2) + beta[None, :, None, None]
    norm = jnp.sqrt(norm)
    return x_nchw * norm if inverse else x_nchw / norm


if __name__ == "__main__":
    ch = 4
    gamma_init = 0.1
    reparam_offset = 2.0 ** (-18)
    pedestal = reparam_offset ** 2

    # Deterministic parameter init exactly as in _GDN.build():
    beta_param = jnp.sqrt(jnp.ones((ch,), jnp.float32) + pedestal)
    gamma_param = jnp.sqrt(gamma_init * jnp.eye(ch, dtype=jnp.float32) + pedestal)

    key = jax.random.PRNGKey(0)
    x = jax.random.normal(key, (2, ch, 16, 16), dtype=jnp.float32)

    out = jax.block_until_ready(gdn_forward(x, beta_param, gamma_param, inverse=False))
    ref = _gdn_reference(x, beta_param, gamma_param, inverse=False)
    assert out.shape == x.shape
    assert jnp.allclose(out, ref, atol=1e-5, rtol=1e-5), \
        float(jnp.max(jnp.abs(out - ref)))

    out_inv = jax.block_until_ready(gdn_forward(x, beta_param, gamma_param, inverse=True))
    ref_inv = _gdn_reference(x, beta_param, gamma_param, inverse=True)
    assert jnp.allclose(out_inv, ref_inv, atol=1e-5, rtol=1e-5), \
        float(jnp.max(jnp.abs(out_inv - ref_inv)))

    print("KERNEL_OK")
</pallas_src>

<mosaic_0001>
module attributes {stable_mosaic.version = 11 : i64} {
  func.func @_gdn_kernel(%arg0: i32, %arg1: i32, %arg2: memref<1x4x256xf32, #tpu.memory_space<vmem>>, %arg3: memref<4x4xf32, #tpu.memory_space<vmem>>, %arg4: memref<4x1xf32, #tpu.memory_space<vmem>>, %arg5: memref<1x4x256xf32, #tpu.memory_space<vmem>>) attributes {dimension_semantics = [#tpu.dimension_semantics<parallel>, #tpu.dimension_semantics<parallel>], iteration_bounds = array<i64: 2, 1>, scalar_prefetch = 0 : i64, scratch_operands = 0 : i64, tpu.core_type = #tpu.core_type<tc>, window_params = [{transform_indices = @transform_0, window_bounds = array<i64: 1, 4, 256>}, {pipeline_mode = #tpu.pipeline_mode<synchronous>, transform_indices = @transform_1, window_bounds = array<i64: 4, 4>}, {pipeline_mode = #tpu.pipeline_mode<synchronous>, transform_indices = @transform_2, window_bounds = array<i64: 4, 1>}, {transform_indices = @transform_3, window_bounds = array<i64: 1, 4, 256>}]} {
    %c0 = arith.constant 0 : index
    %c0_0 = arith.constant 0 : index
    %c0_1 = arith.constant 0 : index
    %0 = vector.load %arg2[%c0, %c0_0, %c0_1] : memref<1x4x256xf32, #tpu.memory_space<vmem>>, vector<1x4x256xf32>
    %1 = vector.shape_cast %0 : vector<1x4x256xf32> to vector<4x256xf32>
    %2 = arith.mulf %1, %1 : vector<4x256xf32>
    %c0_2 = arith.constant 0 : index
    %c0_3 = arith.constant 0 : index
    %3 = vector.load %arg3[%c0_2, %c0_3] : memref<4x4xf32, #tpu.memory_space<vmem>>, vector<4x4xf32>
    %c0_4 = arith.constant 0 : index
    %c0_5 = arith.constant 0 : index
    %4 = vector.load %arg4[%c0_4, %c0_5] : memref<4x1xf32, #tpu.memory_space<vmem>>, vector<4x1xf32>
    %5 = vector.shape_cast %4 : vector<4x1xf32> to vector<4x1xf32>
    %6 = vector.broadcast %5 : vector<4x1xf32> to vector<4x256xf32>
    %7 = vector.extract_strided_slice %3 {offsets = [0, 0], sizes = [4, 1], strides = [1, 1]} : vector<4x4xf32> to vector<4x1xf32>
    %8 = vector.extract_strided_slice %2 {offsets = [0, 0], sizes = [1, 256], strides = [1, 1]} : vector<4x256xf32> to vector<1x256xf32>
    %9 = vector.broadcast %7 : vector<4x1xf32> to vector<4x256xf32>
    %10 = vector.broadcast %8 : vector<1x256xf32> to vector<4x256xf32>
    %11 = arith.mulf %9, %10 : vector<4x256xf32>
    %12 = arith.addf %6, %11 : vector<4x256xf32>
    %13 = vector.extract_strided_slice %3 {offsets = [0, 1], sizes = [4, 1], strides = [1, 1]} : vector<4x4xf32> to vector<4x1xf32>
    %14 = vector.extract_strided_slice %2 {offsets = [1, 0], sizes = [1, 256], strides = [1, 1]} : vector<4x256xf32> to vector<1x256xf32>
    %15 = vector.broadcast %13 : vector<4x1xf32> to vector<4x256xf32>
    %16 = vector.broadcast %14 : vector<1x256xf32> to vector<4x256xf32>
    %17 = arith.mulf %15, %16 : vector<4x256xf32>
    %18 = arith.addf %12, %17 : vector<4x256xf32>
    %19 = vector.extract_strided_slice %3 {offsets = [0, 2], sizes = [4, 1], strides = [1, 1]} : vector<4x4xf32> to vector<4x1xf32>
    %20 = vector.extract_strided_slice %2 {offsets = [2, 0], sizes = [1, 256], strides = [1, 1]} : vector<4x256xf32> to vector<1x256xf32>
    %21 = vector.broadcast %19 : vector<4x1xf32> to vector<4x256xf32>
    %22 = vector.broadcast %20 : vector<1x256xf32> to vector<4x256xf32>
    %23 = arith.mulf %21, %22 : vector<4x256xf32>
    %24 = arith.addf %18, %23 : vector<4x256xf32>
    %25 = vector.extract_strided_slice %3 {offsets = [0, 3], sizes = [4, 1], strides = [1, 1]} : vector<4x4xf32> to vector<4x1xf32>
    %26 = vector.extract_strided_slice %2 {offsets = [3, 0], sizes = [1, 256], strides = [1, 1]} : vector<4x256xf32> to vector<1x256xf32>
    %27 = vector.broadcast %25 : vector<4x1xf32> to vector<4x256xf32>
    %28 = vector.broadcast %26 : vector<1x256xf32> to vector<4x256xf32>
    %29 = arith.mulf %27, %28 : vector<4x256xf32>
    %30 = arith.addf %24, %29 : vector<4x256xf32>
    %31 = math.rsqrt %30 : vector<4x256xf32>
    %32 = arith.mulf %1, %31 : vector<4x256xf32>
    %c0_6 = arith.constant 0 : index
    %c0_7 = arith.constant 0 : index
    %c0_8 = arith.constant 0 : index
    %33 = vector.load %arg5[%c0_6, %c0_7, %c0_8] : memref<1x4x256xf32, #tpu.memory_space<vmem>>, vector<1x4x256xf32>
    %34 = vector.shape_cast %33 : vector<1x4x256xf32> to vector<4x256xf32>
    %35 = vector.shape_cast %32 : vector<4x256xf32> to vector<1x4x256xf32>
    tpu.vector_store %arg5[%c0_6, %c0_7, %c0_8], %35 {strides = array<i32>} : memref<1x4x256xf32, #tpu.memory_space<vmem>>, vector<1x4x256xf32>,
    return
  }
  func.func @transform_0(%arg0: i32, %arg1: i32) -> (i32, i32, i32) {
    %c0_i32 = arith.constant 0 : i32
    %c0_i32_0 = arith.constant 0 : i32
    return %arg0, %c0_i32, %arg1 : i32, i32, i32
  }
  func.func @transform_1(%arg0: i32, %arg1: i32) -> (i32, i32) {
    %c0_i32 = arith.constant 0 : i32
    %c0_i32_0 = arith.constant 0 : i32
    %c0_i32_1 = arith.constant 0 : i32
    return %c0_i32, %c0_i32_0 : i32, i32
  }
  func.func @transform_2(%arg0: i32, %arg1: i32) -> (i32, i32) {
    %c0_i32 = arith.constant 0 : i32
    %c0_i32_0 = arith.constant 0 : i32
    %c0_i32_1 = arith.constant 0 : i32
    return %c0_i32, %c0_i32_0 : i32, i32
  }
  func.func @transform_3(%arg0: i32, %arg1: i32) -> (i32, i32, i32) {
    %c0_i32 = arith.constant 0 : i32
    %c0_i32_0 = arith.constant 0 : i32
    return %arg0, %c0_i32, %arg1 : i32, i32, i32
  }
}

</mosaic_0001>

<llo_original>
// kernel: tpu_custom_call.1
$region0: #{tpu_custom_call.1}
  #allocation0 [shape = 'u32[]', space=smem, size = 0x4, offset = 0x4, fixed_abs, tag = 'smem constant byte address 0x4 - core index']
  #allocation1 [shape = 'u32[144,128]{1,0:T(1,128)}', space=vmem, size = 0x12000, scoped, tag = 'internal scratch']
  %s0 = inlined_call_operand.hbm [shape: f32[2,4,256], index: 0, kind: input, shape index: {}]
  %s1 = inlined_call_operand.vmem [shape: f32[4,4], index: 1, kind: input, shape index: {}]
  %s2 = inlined_call_operand.vmem [shape: f32[4,1], index: 2, kind: input, shape index: {}]
  %s3 = inlined_call_operand.hbm [shape: f32[2,4,256], index: 3, kind: output, shape index: {}]
  %s4 = sld [smem:[#allocation0]]
  $region49: #{tpu_custom_call.1} parent=0
    _
  %s6 = ssub.s32 1, %s4
  %s7 = scalar_select 0, %s6, %s4
  $region1: #{tpu_custom_call.1} parent=0
    #allocation2 [shape = 'u8[8192]{0}', space=vmem, size = 0x2000, scoped, tag = 'input window, operand 0']
    #allocation3 [shape = 's32[2]{0}', space=sflag, size = 0x8, scoped, tag = 'scoped memory for tpu_custom_call.1']
    #allocation4 [shape = 's32[2]{0}', space=sflag, size = 0x8, scoped, tag = 'scoped memory for tpu_custom_call.1']
    #allocation5 [shape = 'u8[8192]{0}', space=vmem, size = 0x2000, scoped, tag = 'output window, operand 0']
    %8 = vsyncpa [#allocation3], 0
    %s9 = scalar_lea.sflag [#allocation3], 1
    %10 = vsyncpa %s9, 0
    %11 = vsyncpa [#allocation4], 0
    %s12 = scalar_lea.sflag [#allocation4], 1
    %13 = vsyncpa %s12, 0
    loop: start=0, step=1, limit=4
    $region2: #{tpu_custom_call.1} parent=1 // loop_pre_header
      _
    $region3: #{tpu_custom_call.1} parent=1 // loop_header
      %s15 = sphi 0, %s19
      %p16 = scmp.ge.s32.totalorder %s15, 4
      %s22 = sphi 0, %s34
      %s23 = sphi 0, %s30
      %s24 = sphi 0, %s22
      %s25 = sphi 0, %s23
      %s26 = sphi 0, %s24
      %s27 = sphi 0, %s25
      %s39 = sphi 0, %s41
      %s42 = sphi 0, %s39
      %s43 = sphi 0, %s42
      %s59 = sphi 0, %s43
      %s63 = sphi 0, %s63
      %s65 = sphi 0, %s63
      %s66 = sphi 0, %s65
      %s80 = sphi 0, %s66
      %s84 = sphi 0, %s84
      %s86 = sphi 0, %s84
      %s87 = sphi 0, %s86
      %s101 = sphi 0, %s87
      %s109 = sphi 0, %s111
      %s112 = sphi 0, %s109
      %s113 = sphi 0, %s112
      %s129 = sphi 0, %s113
    $region4: #{tpu_custom_call.1} parent=1 // loop_header_branch
      %18 = sbr.rel (%p16) target = $region8
    $region5: #{tpu_custom_call.1} parent=1 // loop_body
      %s20 = ssub.s32 %s15, 1
      %s21 = ssub.s32 %s15, 2
      %s28 = sadd.s32 1, %s23
      %p29 = scmp.ge.s32.totalorder %s28, 1
      %s30 = scalar_select %p29, 0, %s28
      %s31 = sadd.s32 1, %s22
      %s32 = scalar_select %p29, %s31, %s22
      %p33 = scmp.ge.s32.totalorder %s32, 2
      %s34 = scalar_select %p33, 0, %s32
      %s35 = ssub.s32 %s22, %s34
      %s36 = ssub.s32 %s23, %s30
      %s37 = sor.u32 %s35, %s36
      %p38 = scmp.eq.s32.totalorder %s37, 0
      %s40 = sadd.s32 %s39, 1
      %s41 = scalar_select %p38, %s39, %s40
      %p44 = pneg %p38
      %p45 = scmp.eq.s32.totalorder %s15, 1
      %p46 = por %p44, %p45
      %p47 = scmp.ne.s32.totalorder %s39, %s42
      %p48 = scmp.eq.s32.totalorder %s15, 0
      %p49 = por %p47, %p48
      %p50 = scmp.ne.s32.totalorder %s39, %s42
      %p51 = scmp.eq.s32.totalorder %s20, 1
      %p52 = por %p50, %p51
      %p53 = scmp.ne.s32.totalorder %s42, %s43
      %p54 = scmp.eq.s32.totalorder %s20, 0
      %p55 = por %p53, %p54
      %p56 = scmp.ne.s32.totalorder %s42, %s43
      %p57 = scmp.eq.s32.totalorder %s21, 1
      %p58 = por %p56, %p57
      %p60 = scmp.ne.s32.totalorder %s43, %s59
      %p61 = scmp.eq.s32.totalorder %s21, 0
      %p62 = por %p60, %p61
      %s64 = sadd.s32 %s63, 1
      %p67 = scmp.eq.s32.totalorder %s15, 1
      %p68 = scmp.ne.s32.totalorder %s63, %s65
      %p69 = scmp.eq.s32.totalorder %s15, 0
      %p70 = por %p68, %p69
      %p71 = scmp.ne.s32.totalorder %s63, %s65
      %p72 = scmp.eq.s32.totalorder %s20, 1
      %p73 = por %p71, %p72
      %p74 = scmp.ne.s32.totalorder %s65, %s66
      %p75 = scmp.eq.s32.totalorder %s20, 0
      %p76 = por %p74, %p75
      %p77 = scmp.ne.s32.totalorder %s65, %s66
      %p78 = scmp.eq.s32.totalorder %s21, 1
      %p79 = por %p77, %p78
      %p81 = scmp.ne.s32.totalorder %s66, %s80
      %p82 = scmp.eq.s32.totalorder %s21, 0
      %p83 = por %p81, %p82
      %s85 = sadd.s32 %s84, 1
      %p88 = scmp.eq.s32.totalorder %s15, 1
      %p89 = scmp.ne.s32.totalorder %s84, %s86
      %p90 = scmp.eq.s32.totalorder %s15, 0
      %p91 = por %p89, %p90
      %p92 = scmp.ne.s32.totalorder %s84, %s86
      %p93 = scmp.eq.s32.totalorder %s20, 1
      %p94 = por %p92, %p93
      %p95 = scmp.ne.s32.totalorder %s86, %s87
      %p96 = scmp.eq.s32.totalorder %s20, 0
      %p97 = por %p95, %p96
      %p98 = scmp.ne.s32.totalorder %s86, %s87
      %p99 = scmp.eq.s32.totalorder %s21, 1
      %p100 = por %p98, %p99
      %p102 = scmp.ne.s32.totalorder %s87, %s101
      %p103 = scmp.eq.s32.totalorder %s21, 0
      %p104 = por %p102, %p103
      %s105 = ssub.s32 %s22, %s34
      %s106 = ssub.s32 %s23, %s30
      %s107 = sor.u32 %s105, %s106
      %p108 = scmp.eq.s32.totalorder %s107, 0
      %s110 = sadd.s32 %s109, 1
      %s111 = scalar_select %p108, %s109, %s110
      %p114 = pneg %p108
      %p115 = scmp.eq.s32.totalorder %s15, 1
      %p116 = por %p114, %p115
      %p117 = scmp.ne.s32.totalorder %s109, %s112
      %p118 = scmp.eq.s32.totalorder %s15, 0
      %p119 = por %p117, %p118
      %p120 = scmp.ne.s32.totalorder %s109, %s112
      %p121 = scmp.eq.s32.totalorder %s20, 1
      %p122 = por %p120, %p121
      %p123 = scmp.ne.s32.totalorder %s112, %s113
      %p124 = scmp.eq.s32.totalorder %s20, 0
      %p125 = por %p123, %p124
      %p126 = scmp.ne.s32.totalorder %s112, %s113
      %p127 = scmp.eq.s32.totalorder %s21, 1
      %p128 = por %p126, %p127
      %p130 = scmp.ne.s32.totalorder %s113, %s129
      %p131 = scmp.eq.s32.totalorder %s21, 0
      %p132 = por %p130, %p131
      %p133 = scmp.le.s32.totalorder 1, %s15
      %p134 = scmp.lt.s32.totalorder %s15, 3
      %p135 = pnand %p133, %p134
      %p136 = pneg %p135
      // Predicated region
      $region9: #{tpu_custom_call.1} parent=5 // pred_check
        _
      $region10: #{tpu_custom_call.1} parent=5 // pred_check_branch
        %138 = sbr.rel (%p135) target = $region12
      $region11: #{tpu_custom_call.1} parent=5 // pred_region
        %s139 = ssub.s32 %s15, 1
        // Predicated region
        $region13: #{tpu_custom_call.1} parent=11 // pred_check
          %p140 = pneg %p76
        $region14: #{tpu_custom_call.1} parent=11 // pred_check_branch
          %142 = sbr.rel (%p140) target = $region16
        $region15: #{tpu_custom_call.1} parent=11 // pred_region
          _
        $region16: #{tpu_custom_call.1} parent=11 // pred_fallthru
          _
        // Predicated region
        $region17: #{tpu_custom_call.1} parent=11 // pred_check
          %p143 = pneg %p97
        $region18: #{tpu_custom_call.1} parent=11 // pred_check_branch
          %145 = sbr.rel (%p143) target = $region20
        $region19: #{tpu_custom_call.1} parent=11 // pred_region
          _
        $region20: #{tpu_custom_call.1} parent=11 // pred_fallthru
          _
      $region12: #{tpu_custom_call.1} parent=5 // pred_fallthru
        _
      %p146 = scmp.lt.s32.totalorder %s15, 2
      // Predicated region
      $region21: #{tpu_custom_call.1} parent=5 // pred_check
        %p147 = pneg %p146
      $region22: #{tpu_custom_call.1} parent=5 // pred_check_branch
        %149 = sbr.rel (%p147) target = $region24
      $region23: #{tpu_custom_call.1} parent=5 // pred_region
        // Predicated region
        $region25: #{tpu_custom_call.1} parent=23 // pred_check
          %p150 = pneg %p49
        $region26: #{tpu_custom_call.1} parent=23 // pred_check_branch
          %152 = sbr.rel (%p150) target = $region28
        $region27: #{tpu_custom_call.1} parent=23 // pred_region
          %s153 = sand.u32 %s39, 1
          %s154 = scalar_lea.sflag [#allocation3], %s153
          %s155 = sand.u32 %s39, 1
          %s156 = smul.addr %s155, 8
          %s157 = scalar_lea.vmem [#allocation2], %s156
          %s158 = smul.u32 2, %s23
          %s160 = ssub.s32 128, 128
          %161 = vsyncadd %s154, %s160
          %s162 = smul.addr %s22, 2
          %s163 = sadd.s32 %s158, %s162
          %s164 = smul.addr %s163, 64
          %s165 = scalar_lea.hbm %s0, %s164
          %s167 = sshll.u32 %s157, 4
          %s168 = int_to_ptr.vmem [resolvable:$true] %s167
          %170 = dma.hbm_to_vmem [thread:$0]  %s165, 128, %s168, %s154
        $region28: #{tpu_custom_call.1} parent=23 // pred_fallthru
          _
      $region24: #{tpu_custom_call.1} parent=5 // pred_fallthru
        _
      %p171 = scmp.le.s32.totalorder 1, %s15
      %p172 = scmp.lt.s32.totalorder %s15, 3
      %p173 = pnand %p171, %p172
      %p174 = pneg %p173
      // Predicated region
      $region29: #{tpu_custom_call.1} parent=5 // pred_check
        _
      $region30: #{tpu_custom_call.1} parent=5 // pred_check_branch
        %176 = sbr.rel (%p173) target = $region32
      $region31: #{tpu_custom_call.1} parent=5 // pred_region
        %s177 = ssub.s32 %s15, 1
        %s178 = sand.u32 %s42, 1
        %s179 = scalar_lea.sflag [#allocation3], %s178
        %s180 = sand.u32 %s42, 1
        %s181 = smul.addr %s180, 8
        %s182 = scalar_lea.vmem [#allocation2], %s181
        // Predicated region
        $region33: #{tpu_custom_call.1} parent=31 // pred_check
          %p183 = pneg %p55
        $region34: #{tpu_custom_call.1} parent=31 // pred_check_branch
          %185 = sbr.rel (%p183) target = $region36
        $region35: #{tpu_custom_call.1} parent=31 // pred_region
          %186 = dma.done %s179, 128
        $region36: #{tpu_custom_call.1} parent=31 // pred_fallthru
          _
        %s187 = sand.u32 %s42, 1
        %s188 = scalar_lea.sflag [#allocation3], %s187
        %s189 = sand.u32 %s42, 1
        %s190 = smul.addr %s189, 8
        %s191 = scalar_lea.vmem [#allocation2], %s190
        %p192 = pneg %p55
        %p193 = pneg %p52
        %p194 = pneg %p76
        %p195 = pneg %p73
        %p196 = pneg %p97
        %p197 = pneg %p94
        %p198 = pneg %p125
        %p199 = pneg %p122
        %s200 = sand.u32 %s112, 1
        %s201 = scalar_lea.sflag [#allocation4], %s200
        %s202 = sand.u32 %s112, 1
        %s203 = smul.addr %s202, 8
        %s204 = scalar_lea.vmem [#allocation5], %s203
        %s205 = smul.u32 2, %s25
        %s206 = smul.u32 2, %s25
        %v207 = vld [vmem:[%s182] sm:$0xff]
        %v208 = vmul.f32 %v207, %v207
        %v209 = vld [vmem:[%s1] sm:$0xf]
        %v210 = vld [vmem:[%s2] sm:$0xf]
        %212 = vset.pattern.permute.xlu0 0
        %213 = vperm.xlu0 %212, %v210
        %v214 = vpop.permute.xlu0 %213
        %217 = vset.pattern.permute.xlu0 0
        %218 = vperm.xlu0 %217, %v209
        %v219 = vpop.permute.xlu0 %218
        %v222 = vlaneseq
        %v223 = vshrl.u32 %v222, 7
        %v224 = vsub.s32 0, %v223
        %v225 = vrot.slane %v208, %v224
        %v226 = vlaneseq
        %v227 = vshrl.u32 %v226, 7
        %v228 = vsub.s32 4, %v227
        %v229 = vrot.slane %v208, %v228
        %v232 = vlaneseq
        %v233 = vshrl.u32 %v232, 7
        %v234 = vsub.s32 0, %v233
        %v235 = vrot.slane %v225, %v234
        %v236 = vlaneseq
        %v237 = vshrl.u32 %v236, 7
        %v238 = vsub.s32 0, %v237
        %v239 = vrot.slane %v229, %v238
        %v240 = vmul.f32 %v219, %v235
        %v241 = vmul.f32 %v219, %v239
        %v242 = vadd.f32 %v214, %v240
        %v243 = vadd.f32 %v214, %v241
        %244 = vset.pattern.permute.xlu0 1
        %245 = vperm.xlu0 %244, %v209
        %v246 = vpop.permute.xlu0 %245
        %v248 = vlaneseq
        %v249 = vshrl.u32 %v248, 7
        %v250 = vsub.s32 1, %v249
        %v251 = vrot.slane %v208, %v250
        %v252 = vlaneseq
        %v253 = vshrl.u32 %v252, 7
        %v254 = vsub.s32 5, %v253
        %v255 = vrot.slane %v208, %v254
        %v258 = vlaneseq
        %v259 = vshrl.u32 %v258, 7
        %v260 = vsub.s32 1, %v259
        %v261 = vrot.slane %v251, %v260
        %v262 = vlaneseq
        %v263 = vshrl.u32 %v262, 7
        %v264 = vsub.s32 1, %v263
        %v265 = vrot.slane %v255, %v264
        %v266 = vmul.f32 %v246, %v261
        %v267 = vmul.f32 %v246, %v265
        %v268 = vadd.f32 %v242, %v266
        %v269 = vadd.f32 %v243, %v267
        %270 = vset.pattern.permute.xlu0 2
        %271 = vperm.xlu0 %270, %v209
        %v272 = vpop.permute.xlu0 %271
        %v274 = vlaneseq
        %v275 = vshrl.u32 %v274, 7
        %v276 = vsub.s32 2, %v275
        %v277 = vrot.slane %v208, %v276
        %v278 = vlaneseq
        %v279 = vshrl.u32 %v278, 7
        %v280 = vsub.s32 6, %v279
        %v281 = vrot.slane %v208, %v280
        %v284 = vlaneseq
        %v285 = vshrl.u32 %v284, 7
        %v286 = vsub.s32 2, %v285
        %v287 = vrot.slane %v277, %v286
        %v288 = vlaneseq
        %v289 = vshrl.u32 %v288, 7
        %v290 = vsub.s32 2, %v289
        %v291 = vrot.slane %v281, %v290
        %v292 = vmul.f32 %v272, %v287
        %v293 = vmul.f32 %v272, %v291
        %v294 = vadd.f32 %v268, %v292
        %v295 = vadd.f32 %v269, %v293
        %296 = vset.pattern.permute.xlu0 3
        %297 = vperm.xlu0 %296, %v209
        %v298 = vpop.permute.xlu0 %297
        %v300 = vlaneseq
        %v301 = vshrl.u32 %v300, 7
        %v302 = vsub.s32 3, %v301
        %v303 = vrot.slane %v208, %v302
        %v304 = vlaneseq
        %v305 = vshrl.u32 %v304, 7
        %v306 = vsub.s32 7, %v305
        %v307 = vrot.slane %v208, %v306
        %v310 = vlaneseq
        %v311 = vshrl.u32 %v310, 7
        %v312 = vsub.s32 3, %v311
        %v313 = vrot.slane %v303, %v312
        %v314 = vlaneseq
        %v315 = vshrl.u32 %v314, 7
        %v316 = vsub.s32 3, %v315
        %v317 = vrot.slane %v307, %v316
        %v318 = vmul.f32 %v298, %v313
        %v319 = vmul.f32 %v298, %v317
        %v320 = vadd.f32 %v294, %v318
        %v321 = vadd.f32 %v295, %v319
        %v322 = vrsqrt.pop %v320
        %v323 = vrsqrt.pop %v321
        %v326 = vcombine.low %v322, %v323
        %v328 = vmul.f32 %v207, %v326
        %329 = vst [vmem:[%s204] sm:$0xff] %v328
        %s330 = sand.u32 %s112, 1
        %s331 = scalar_lea.sflag [#allocation4], %s330
        %s332 = sand.u32 %s112, 1
        %s333 = smul.addr %s332, 8
        %s334 = scalar_lea.vmem [#allocation5], %s333
        // Predicated region
        $region37: #{tpu_custom_call.1} parent=31 // pred_check
          %p335 = pneg %p122
        $region38: #{tpu_custom_call.1} parent=31 // pred_check_branch
          %337 = sbr.rel (%p335) target = $region40
        $region39: #{tpu_custom_call.1} parent=31 // pred_region
          %s338 = smul.u32 2, %s25
          %s340 = ssub.s32 128, 128
          %341 = vsyncadd %s331, %s340
          %s342 = smul.addr %s24, 2
          %s343 = sadd.s32 %s338, %s342
          %s344 = smul.addr %s343, 64
          %s345 = scalar_lea.hbm %s3, %s344
          %s347 = sshll.u32 %s334, 4
          %s348 = int_to_ptr.vmem [resolvable:$true] %s347
          %350 = dma.vmem_to_hbm [thread:$0]  %s348, 128, %s345, %s331
        $region40: #{tpu_custom_call.1} parent=31 // pred_fallthru
          _
      $region32: #{tpu_custom_call.1} parent=5 // pred_fallthru
        _
      %p351 = scmp.le.s32.totalorder 2, %s15
      // Predicated region
      $region41: #{tpu_custom_call.1} parent=5 // pred_check
        %p352 = pneg %p351
      $region42: #{tpu_custom_call.1} parent=5 // pred_check_branch
        %354 = sbr.rel (%p352) target = $region44
      $region43: #{tpu_custom_call.1} parent=5 // pred_region
        %s355 = ssub.s32 %s15, 2
        // Predicated region
        $region45: #{tpu_custom_call.1} parent=43 // pred_check
          %p356 = pneg %p128
        $region46: #{tpu_custom_call.1} parent=43 // pred_check_branch
          %358 = sbr.rel (%p356) target = $region48
        $region47: #{tpu_custom_call.1} parent=43 // pred_region
          %s359 = sand.u32 %s113, 1
          %s360 = scalar_lea.sflag [#allocation4], %s359
          %s361 = sand.u32 %s113, 1
          %s362 = smul.addr %s361, 8
          %s363 = scalar_lea.vmem [#allocation5], %s362
          %364 = dma.done %s360, 128
        $region48: #{tpu_custom_call.1} parent=43 // pred_fallthru
          _
      $region44: #{tpu_custom_call.1} parent=5 // pred_fallthru
        _
    $region6: #{tpu_custom_call.1} parent=1 // loop_footer
      %s19 = sadd.s32 1, %s15
    $region7: #{tpu_custom_call.1} parent=1 // loop_footer_branch
      %14 = sbr.rel target = $region3
    $region8: #{tpu_custom_call.1} parent=1 // loop_exit
      _
    %365 = vsyncpa [#allocation3], 1
    %s366 = scalar_lea.sflag [#allocation3], 1
    %367 = vsyncpa %s366, 1
    %368 = vsyncpa [#allocation4], 1
    %s369 = scalar_lea.sflag [#allocation4], 1
    %370 = vsyncpa %s369, 1

</llo_original>
